<compile_context>
chip_gen: v5e
topology: v5e:2x2
jax: 0.10.0
libtpu: 0.0.40
codegen_flags: <defaults>
</compile_context>

<pallas_src>
import functools
import math

import numpy as np
import jax
import jax.numpy as jnp
from jax.experimental import pallas as pl
from jax.experimental.pallas import tpu as pltpu


def _round_up(x, n):
    return ((x + n - 1) // n) * n


# ----------------------------------------------------------------------------
# Pallas kernel: normalize -> cosine matmul -> ArcFace margin -> fused select
# ----------------------------------------------------------------------------
def _make_arcface_kernel(*, s, cos_m, sin_m, th, mm, easy_margin, tile_c,
                         with_cosine):
    def kernel(x_ref, w_ref, lab_ref, out_ref, *cos_refs):
        x = x_ref[...]                       # (B, D)
        w = w_ref[...]                       # (tile_c, D)
        if x.dtype != jnp.float32:
            x = x.astype(jnp.float32)
        if w.dtype != jnp.float32:
            w = w.astype(jnp.float32)

        # F.normalize(v, dim=1, eps=1e-12) == v * rsqrt(max(||v||^2, 1e-24))
        # rsqrt runs on the EUP slot; multiply replaces a per-element divide.
        xn = x * jax.lax.rsqrt(
            jnp.maximum(jnp.sum(x * x, axis=-1, keepdims=True), 1e-24))
        wn = w * jax.lax.rsqrt(
            jnp.maximum(jnp.sum(w * w, axis=-1, keepdims=True), 1e-24))

        # cosine = xn @ wn.T, contracting the last (lane) dim of both operands
        # so no (tile_c, D) -> (D, tile_c) transpose is materialized.
        cosine = jax.lax.dot_general(
            xn, wn, dimension_numbers=(((1,), (1,)), ((), ())),
            preferred_element_type=jnp.float32)          # (B, tile_c)

        sine = jnp.sqrt(jnp.maximum(1.0 - cosine * cosine, 0.0))
        phi = cosine * cos_m - sine * sin_m
        if easy_margin:
            phi = jnp.where(cosine > 0.0, phi, cosine)
        else:
            phi = jnp.where(cosine - th > 0.0, phi, cosine - mm)

        # one-hot blend fused into a single select; iota offset by the class
        # tile this grid step is responsible for.
        B, TC = cosine.shape
        col_ids = (jax.lax.broadcasted_iota(jnp.int32, (B, TC), 1)
                   + pl.program_id(0) * tile_c)
        out_ref[...] = s * jnp.where(col_ids == lab_ref[...], phi, cosine)
        if with_cosine:
            cos_refs[0][...] = s * cosine

    return kernel


def arcface_pallas(x, weight, label_new, *, s=32.0, m=0.5, easy_margin=False,
                   with_cosine=False, tile_c=None):
    """ArcFace hot path as a class-tiled Pallas TPU kernel.

    Returns (margin_output, s*cosine) if with_cosine else (margin_output, None),
    each of shape (B, C) float32.
    """
    B, D = x.shape
    C, D2 = weight.shape
    assert D == D2

    # Lane-dense class tiles (multiple of 128); pad the class axis so every
    # output store is a full-lane vst, then slice the padding off outside.
    if tile_c is None:
        tile_c = 512 if C >= 512 else _round_up(C, 128)
    tile_c = _round_up(int(tile_c), 128)
    c_pad = _round_up(C, tile_c)
    if c_pad != C:
        weight = jnp.pad(weight, ((0, c_pad - C), (0, 0)))
    n_tiles = c_pad // tile_c

    kernel = _make_arcface_kernel(
        s=float(s), cos_m=math.cos(m), sin_m=math.sin(m),
        th=math.cos(math.pi - m), mm=math.sin(math.pi - m) * m,
        easy_margin=bool(easy_margin), tile_c=tile_c, with_cosine=with_cosine)

    lab2d = label_new.reshape(B, 1).astype(jnp.int32)

    out_shapes = [jax.ShapeDtypeStruct((B, c_pad), jnp.float32)]
    out_specs = [pl.BlockSpec((B, tile_c), lambda j: (0, j))]
    if with_cosine:
        out_shapes.append(jax.ShapeDtypeStruct((B, c_pad), jnp.float32))
        out_specs.append(pl.BlockSpec((B, tile_c), lambda j: (0, j)))

    n_out = 2 if with_cosine else 1
    itemsize = jnp.dtype(weight.dtype).itemsize
    cost = pl.CostEstimate(
        flops=2 * B * c_pad * D + 8 * B * c_pad,
        transcendentals=B + c_pad + B * c_pad,
        bytes_accessed=B * D * 4 + c_pad * D * itemsize + n_out * B * c_pad * 4)

    results = pl.pallas_call(
        kernel,
        out_shape=tuple(out_shapes),
        grid=(n_tiles,),
        in_specs=[
            pl.BlockSpec((B, D), lambda j: (0, 0)),        # x: whole batch
            pl.BlockSpec((tile_c, D), lambda j: (j, 0)),   # weight: class tile
            pl.BlockSpec((B, 1), lambda j: (0, 0)),        # remapped labels
        ],
        out_specs=tuple(out_specs),
        compiler_params=pltpu.CompilerParams(
            dimension_semantics=("parallel",),             # v7x: 2 TCs share the grid
            vmem_limit_bytes=32 * 1024 * 1024),            # safe on v5e/v6e/v7x
        cost_estimate=cost,
    )(x, weight, lab2d)

    out = results[0][:, :C]
    if with_cosine:
        return out, results[1][:, :C]
    return out, None


# ----------------------------------------------------------------------------
# Module wrapper reproducing DictArcMarginProduct's stateful host-side logic
# ----------------------------------------------------------------------------
class DictArcMarginProductJAX:
    def __init__(self, in_features=128, out_features=200, out_features_test=74974,
                 s=32.0, m=0.5, label_dict=None, easy_margin=False,
                 key=jax.random.PRNGKey(0)):
        self.in_features = in_features
        self.out_features = out_features
        self.s = s
        self.m = m
        self.easy_margin = easy_margin
        self.label_dict = label_dict
        self.need_back_label_list = []
        # xavier_uniform_ for weight (out_features, in_features)
        limit = math.sqrt(6.0 / (in_features + out_features))
        self.weight = jax.random.uniform(
            key, (out_features, in_features), jnp.float32, -limit, limit)
        # weight_test is uninitialized in torch; use zeros (deterministic init)
        self.weight_test = jnp.zeros((out_features_test, in_features), jnp.float32)

    def forward(self, x, label, label_set, testing=False):
        if testing:
            return self.forward_test(x, label, label_set)
        return self.forward_train(x, label, label_set)

    # ---- host-side dictionary / weight-row bookkeeping (glue, not hot path) ----
    def _remap_and_update(self, x, label, label_set, weight, label_new_init):
        label_np = np.asarray(label)
        label_new = np.array(label_new_init, dtype=np.int64)
        used_ind_set = set()
        filter_labels = []
        for label_id in label_set:
            assert label_id in self.label_dict
            idx = self.label_dict[label_id]
            assert idx < self.out_features
            if idx not in used_ind_set:
                mask = label_np == label_id
                label_new[mask] = idx
                rows = np.nonzero(mask)[0]
                weight = weight.at[idx].set(jnp.sum(x[rows], axis=0))
                used_ind_set.add(idx)
            else:
                if label_id not in filter_labels:
                    filter_labels.append(label_id)
        candidate_set = sorted(set(range(self.out_features)) - used_ind_set)
        return label_new, weight, filter_labels, candidate_set

    def forward_train(self, x, label, label_set):
        # restore rows that were temporarily swapped out last step
        for label_id in self.need_back_label_list:
            self.weight = self.weight.at[label_id].set(self.weight_test[label_id])
            self.weight_test = self.weight_test.at[label_id].set(0.0)
        self.need_back_label_list = []

        label_np = np.asarray(label)
        label_new, weight, filter_labels, candidate_set = self._remap_and_update(
            x, label, label_set, self.weight,
            np.full(label_np.shape, -1, dtype=np.int64))

        sta = 0
        for label_id in filter_labels:
            assert sta < len(candidate_set)
            cand = candidate_set[sta]
            mask = label_np == label_id
            label_new[mask] = cand
            self.weight_test = self.weight_test.at[cand].set(weight[cand])
            rows = np.nonzero(mask)[0]
            weight = weight.at[cand].set(jnp.sum(x[rows], axis=0))
            self.need_back_label_list.append(cand)
            sta += 1
        self.weight = weight

        label_new_j = jnp.asarray(label_new, dtype=jnp.int32)
        # train path: the second (s*cosine) output is never used -> don't write it
        output, _ = arcface_pallas(x, self.weight, label_new_j,
                                   s=self.s, m=self.m, easy_margin=self.easy_margin,
                                   with_cosine=False)
        return output, label_new_j

    def forward_test(self, x, label, label_set):
        for label_id in self.need_back_label_list:
            self.weight = self.weight.at[label_id].set(self.weight_test[label_id])
        self.need_back_label_list = []
        # original: weight_test.data = weight.clone() (replaces it with the
        # out_features-row head); we mirror that with a head-sized working copy.
        n = min(self.weight_test.shape[0], self.weight.shape[0])
        self.weight_test = self.weight_test.at[:n].set(self.weight[:n])

        label_np = np.asarray(label)
        # TODO(synk): the original mutates weight_test (whose shape it just
        # replaced); here we update the first out_features rows deterministically.
        wtest_head = self.weight_test[:self.out_features]
        label_new, wtest_head, filter_labels, candidate_set = self._remap_and_update(
            x, label, label_set, wtest_head, label_np.copy())

        sta = 0
        for label_id in filter_labels:
            cand = candidate_set[sta]
            mask = label_np == label_id
            label_new[mask] = cand
            rows = np.nonzero(mask)[0]
            wtest_head = wtest_head.at[cand].set(jnp.sum(x[rows], axis=0))
            self.need_back_label_list.append(cand)
            sta += 1
        self.weight_test = self.weight_test.at[:self.out_features].set(wtest_head)

        label_new_j = jnp.asarray(label_new, dtype=jnp.int32)
        output0, output1 = arcface_pallas(x, wtest_head, label_new_j,
                                          s=self.s, m=self.m,
                                          easy_margin=self.easy_margin,
                                          with_cosine=True)
        return (output0, output1), label_new_j


# ----------------------------------------------------------------------------
# Pure-JAX reference for correctness check
# ----------------------------------------------------------------------------
def _reference(x, weight, label_new, s, m, easy_margin):
    cos_m, sin_m = math.cos(m), math.sin(m)
    th, mm = math.cos(math.pi - m), math.sin(math.pi - m) * m
    xn = x * jax.lax.rsqrt(jnp.maximum(jnp.sum(x * x, -1, keepdims=True), 1e-24))
    wn = weight * jax.lax.rsqrt(
        jnp.maximum(jnp.sum(weight * weight, -1, keepdims=True), 1e-24))
    cosine = xn @ wn.T
    sine = jnp.sqrt(jnp.maximum(1.0 - cosine ** 2, 0.0))
    phi = cosine * cos_m - sine * sin_m
    if easy_margin:
        phi = jnp.where(cosine > 0, phi, cosine)
    else:
        phi = jnp.where(cosine - th > 0, phi, cosine - mm)
    one_hot = jax.nn.one_hot(label_new, weight.shape[0], dtype=cosine.dtype)
    return (one_hot * phi + (1.0 - one_hot) * cosine) * s


if __name__ == "__main__":
    key = jax.random.PRNGKey(0)
    kx, kw, kx2, kw2, kl2 = jax.random.split(key, 5)

    # ---- module-level test: train path, small head (single class tile) ----
    B, D, C = 8, 128, 16
    x = jax.random.normal(kx, (B, D), jnp.float32)

    # label dictionary: 103 collides with 100 -> exercises the candidate-index path
    label_dict = {100: 0, 101: 1, 102: 2, 103: 0}
    label_set = [100, 101, 102, 103]
    labels = np.array([100, 101, 102, 103, 100, 101, 102, 103], dtype=np.int64)

    mod = DictArcMarginProductJAX(in_features=D, out_features=C,
                                  out_features_test=64, s=32.0, m=0.5,
                                  label_dict=label_dict, easy_margin=False, key=kw)

    out, label_new = mod.forward(x, labels, label_set, testing=False)
    out = jax.block_until_ready(out)
    ref = _reference(x, mod.weight, label_new, mod.s, mod.m, mod.easy_margin)
    np.testing.assert_allclose(np.asarray(out), np.asarray(ref),
                               atol=1e-3, rtol=1e-3)

    # ---- direct kernel test: multi-tile grid with padding + cosine output ----
    # C2=300 with tile_c=128 -> 3 class tiles, class axis padded to 384,
    # exercising the program_id-offset one-hot and the padded/sliced output.
    B2, D2, C2 = 8, 128, 300
    x2 = jax.random.normal(kx2, (B2, D2), jnp.float32)
    w2 = jax.random.normal(kw2, (C2, D2), jnp.float32)
    lab2 = jax.random.randint(kl2, (B2,), 0, C2, dtype=jnp.int32)

    out2, cos2 = arcface_pallas(x2, w2, lab2, s=32.0, m=0.5, easy_margin=False,
                                with_cosine=True, tile_c=128)
    out2, cos2 = jax.block_until_ready((out2, cos2))

    ref2 = _reference(x2, w2, lab2, 32.0, 0.5, False)
    np.testing.assert_allclose(np.asarray(out2), np.asarray(ref2),
                               atol=1e-3, rtol=1e-3)
    xn2 = x2 * jax.lax.rsqrt(jnp.maximum(jnp.sum(x2 * x2, -1, keepdims=True), 1e-24))
    wn2 = w2 * jax.lax.rsqrt(jnp.maximum(jnp.sum(w2 * w2, -1, keepdims=True), 1e-24))
    ref_cos2 = 32.0 * (xn2 @ wn2.T)
    np.testing.assert_allclose(np.asarray(cos2), np.asarray(ref_cos2),
                               atol=1e-3, rtol=1e-3)

    print("KERNEL_OK")
</pallas_src>

<mosaic_0001>
module attributes {stable_mosaic.version = 11 : i64} {
  func.func @kernel(%arg0: i32, %arg1: memref<8x128xf32, #tpu.memory_space<vmem>>, %arg2: memref<128x128xf32, #tpu.memory_space<vmem>>, %arg3: memref<8x1xi32, #tpu.memory_space<vmem>>, %arg4: memref<8x128xf32, #tpu.memory_space<vmem>>) attributes {dimension_semantics = [#tpu.dimension_semantics<parallel>], iteration_bounds = array<i64: 1>, scalar_prefetch = 0 : i64, scratch_operands = 0 : i64, tpu.core_type = #tpu.core_type<tc>, window_params = [{pipeline_mode = #tpu.pipeline_mode<synchronous>, transform_indices = @transform_0, window_bounds = array<i64: 8, 128>}, {transform_indices = @transform_1, window_bounds = array<i64: 128, 128>}, {pipeline_mode = #tpu.pipeline_mode<synchronous>, transform_indices = @transform_2, window_bounds = array<i64: 8, 1>}, {transform_indices = @transform_3, window_bounds = array<i64: 8, 128>}]} {
    %c0 = arith.constant 0 : index
    %c0_0 = arith.constant 0 : index
    %0 = vector.load %arg1[%c0, %c0_0] : memref<8x128xf32, #tpu.memory_space<vmem>>, vector<8x128xf32>
    %c0_1 = arith.constant 0 : index
    %c0_2 = arith.constant 0 : index
    %1 = vector.load %arg2[%c0_1, %c0_2] : memref<128x128xf32, #tpu.memory_space<vmem>>, vector<128x128xf32>
    %2 = arith.mulf %0, %0 : vector<8x128xf32>
    %cst = arith.constant dense<0.000000e+00> : vector<8xf32>
    %3 = vector.multi_reduction <add>, %2, %cst [1] : vector<8x128xf32> to vector<8xf32>
    %4 = vector.shape_cast %3 : vector<8xf32> to vector<8x1xf32>
    %cst_3 = arith.constant 1.000000e-24 : f32
    %5 = vector.broadcast %cst_3 : f32 to vector<8x1xf32>
    %6 = arith.maximumf %4, %5 : vector<8x1xf32>
    %7 = math.rsqrt %6 : vector<8x1xf32>
    %8 = vector.broadcast %7 : vector<8x1xf32> to vector<8x128xf32>
    %9 = arith.mulf %0, %8 : vector<8x128xf32>
    %10 = arith.mulf %1, %1 : vector<128x128xf32>
    %cst_4 = arith.constant dense<0.000000e+00> : vector<128xf32>
    %11 = vector.multi_reduction <add>, %10, %cst_4 [1] : vector<128x128xf32> to vector<128xf32>
    %12 = vector.shape_cast %11 : vector<128xf32> to vector<128x1xf32>
    %cst_5 = arith.constant 1.000000e-24 : f32
    %13 = vector.broadcast %cst_5 : f32 to vector<128x1xf32>
    %14 = arith.maximumf %12, %13 : vector<128x1xf32>
    %15 = math.rsqrt %14 : vector<128x1xf32>
    %16 = vector.broadcast %15 : vector<128x1xf32> to vector<128x128xf32>
    %17 = arith.mulf %1, %16 : vector<128x128xf32>
    %cst_6 = arith.constant dense<0.000000e+00> : vector<8x128xf32>
    %18 = tpu.matmul %9, %17, %cst_6 {dimension_numbers = #tpu.dot_dimension_numbers<[1], [1], [0], [0], [0, 0, 1, 0], [], []>} : vector<8x128xf32>, vector<128x128xf32>, vector<8x128xf32> -> vector<8x128xf32>
    %19 = arith.mulf %18, %18 : vector<8x128xf32>
    %cst_7 = arith.constant 1.000000e+00 : f32
    %20 = vector.broadcast %cst_7 : f32 to vector<8x128xf32>
    %21 = arith.subf %20, %19 : vector<8x128xf32>
    %cst_8 = arith.constant 0.000000e+00 : f32
    %22 = vector.broadcast %cst_8 : f32 to vector<8x128xf32>
    %23 = arith.maximumf %21, %22 : vector<8x128xf32>
    %24 = math.sqrt %23 : vector<8x128xf32>
    %cst_9 = arith.constant 0.87758255 : f32
    %25 = vector.broadcast %cst_9 : f32 to vector<8x128xf32>
    %26 = arith.mulf %18, %25 : vector<8x128xf32>
    %cst_10 = arith.constant 0.47942555 : f32
    %27 = vector.broadcast %cst_10 : f32 to vector<8x128xf32>
    %28 = arith.mulf %24, %27 : vector<8x128xf32>
    %29 = arith.subf %26, %28 : vector<8x128xf32>
    %cst_11 = arith.constant -0.87758255 : f32
    %30 = vector.broadcast %cst_11 : f32 to vector<8x128xf32>
    %31 = arith.subf %18, %30 : vector<8x128xf32>
    %cst_12 = arith.constant 0.000000e+00 : f32
    %32 = vector.broadcast %cst_12 : f32 to vector<8x128xf32>
    %33 = arith.cmpf ogt, %31, %32 : vector<8x128xf32>
    %cst_13 = arith.constant 0.239712775 : f32
    %34 = vector.broadcast %cst_13 : f32 to vector<8x128xf32>
    %35 = arith.subf %18, %34 : vector<8x128xf32>
    %36 = arith.select %33, %29, %35 : vector<8x128xi1>, vector<8x128xf32>
    %37 = tpu.iota {dimensions = array<i32: 1>} : vector<8x128xi32>
    %c128_i32 = arith.constant 128 : i32
    %38 = arith.muli %arg0, %c128_i32 : i32
    %39 = vector.broadcast %38 : i32 to vector<8x128xi32>
    %40 = arith.addi %37, %39 : vector<8x128xi32>
    %c0_14 = arith.constant 0 : index
    %c0_15 = arith.constant 0 : index
    %41 = vector.load %arg3[%c0_14, %c0_15] : memref<8x1xi32, #tpu.memory_space<vmem>>, vector<8x1xi32>
    %42 = vector.broadcast %41 : vector<8x1xi32> to vector<8x128xi32>
    %43 = arith.cmpi eq, %40, %42 : vector<8x128xi32>
    %44 = arith.select %43, %36, %18 : vector<8x128xi1>, vector<8x128xf32>
    %cst_16 = arith.constant 3.200000e+01 : f32
    %45 = vector.broadcast %cst_16 : f32 to vector<8x128xf32>
    %46 = arith.mulf %45, %44 : vector<8x128xf32>
    %c0_17 = arith.constant 0 : index
    %c0_18 = arith.constant 0 : index
    %47 = vector.load %arg4[%c0_17, %c0_18] : memref<8x128xf32, #tpu.memory_space<vmem>>, vector<8x128xf32>
    tpu.vector_store %arg4[%c0_17, %c0_18], %46 {strides = array<i32>} : memref<8x128xf32, #tpu.memory_space<vmem>>, vector<8x128xf32>,
    return
  }
  func.func @transform_0(%arg0: i32) -> (i32, i32) {
    %c0_i32 = arith.constant 0 : i32
    %c0_i32_0 = arith.constant 0 : i32
    %c0_i32_1 = arith.constant 0 : i32
    return %c0_i32, %c0_i32_0 : i32, i32
  }
  func.func @transform_1(%arg0: i32) -> (i32, i32) {
    %c0_i32 = arith.constant 0 : i32
    %c0_i32_0 = arith.constant 0 : i32
    return %arg0, %c0_i32 : i32, i32
  }
  func.func @transform_2(%arg0: i32) -> (i32, i32) {
    %c0_i32 = arith.constant 0 : i32
    %c0_i32_0 = arith.constant 0 : i32
    %c0_i32_1 = arith.constant 0 : i32
    return %c0_i32, %c0_i32_0 : i32, i32
  }
  func.func @transform_3(%arg0: i32) -> (i32, i32) {
    %c0_i32 = arith.constant 0 : i32
    %c0_i32_0 = arith.constant 0 : i32
    return %c0_i32, %arg0 : i32, i32
  }
}

</mosaic_0001>

<llo_original>
// kernel: tpu_custom_call.1
$region0: #{tpu_custom_call.1}
  #allocation0 [shape = 'u32[]', space=smem, size = 0x4, offset = 0x4, fixed_abs, tag = 'smem constant byte address 0x4 - core index']
  #allocation1 [shape = 'u32[72,128]{1,0:T(1,128)}', space=vmem, size = 0x9000, scoped, tag = 'internal scratch']
  %s0 = inlined_call_operand.vmem [shape: f32[8,128], index: 0, kind: input, shape index: {}]
  %s1 = inlined_call_operand.hbm [shape: f32[128,128], index: 1, kind: input, shape index: {}]
  %s2 = inlined_call_operand.vmem [shape: s32[8,1], index: 2, kind: input, shape index: {}]
  %s3 = inlined_call_operand.hbm [shape: f32[8,128], index: 3, kind: output, shape index: {}]
  %s4 = sld [smem:[#allocation0]]
  $region26: #{tpu_custom_call.1} parent=0
    _
  %s6 = ssub.s32 1, %s4
  %s7 = scalar_select 0, %s6, %s4
  $region1: #{tpu_custom_call.1} parent=0
    #allocation2 [shape = 'u8[65536]{0}', space=vmem, size = 0x10000, scoped, tag = 'input window, operand 1, single buffered']
    #allocation3 [shape = 's32[1]{0}', space=sflag, size = 0x4, scoped, tag = 'scoped memory for tpu_custom_call.1']
    #allocation4 [shape = 's32[1]{0}', space=sflag, size = 0x4, scoped, tag = 'scoped memory for tpu_custom_call.1']
    #allocation5 [shape = 'u8[4096]{0}', space=vmem, size = 0x1000, scoped, tag = 'output window, operand 0, single buffered']
    %8 = vsyncpa [#allocation3], 0
    %9 = vsyncpa [#allocation4], 0
    // Predicated region
    $region2: #{tpu_custom_call.1} parent=1 // pred_check
      _
    $region3: #{tpu_custom_call.1} parent=1 // pred_check_branch
      %11 = sbr.rel (0) target = $region5
    $region4: #{tpu_custom_call.1} parent=1 // pred_region
      _
    $region5: #{tpu_custom_call.1} parent=1 // pred_fallthru
      _
    // Predicated region
    $region6: #{tpu_custom_call.1} parent=1 // pred_check
      _
    $region7: #{tpu_custom_call.1} parent=1 // pred_check_branch
      %13 = sbr.rel (0) target = $region9
    $region8: #{tpu_custom_call.1} parent=1 // pred_region
      %15 = vsyncadd [#allocation3], 0
      %s16 = sshll.u32 %s1, 4
      %s17 = int_to_ptr.hbm [resolvable:$true] %s16
      %s18 = sshll.u32 [#allocation2], 4
      %s19 = int_to_ptr.vmem [resolvable:$true] %s18
      %24 = dma.hbm_to_vmem [thread:$0]  %s17, 2048, %s19, [#allocation3], 128, 128, 8
    $region9: #{tpu_custom_call.1} parent=1 // pred_fallthru
      _
    // Predicated region
    $region10: #{tpu_custom_call.1} parent=1 // pred_check
      _
    $region11: #{tpu_custom_call.1} parent=1 // pred_check_branch
      %26 = sbr.rel (0) target = $region13
    $region12: #{tpu_custom_call.1} parent=1 // pred_region
      _
    $region13: #{tpu_custom_call.1} parent=1 // pred_fallthru
      _
    // Predicated region
    $region14: #{tpu_custom_call.1} parent=1 // pred_check
      _
    $region15: #{tpu_custom_call.1} parent=1 // pred_check_branch
      %28 = sbr.rel (0) target = $region17
    $region16: #{tpu_custom_call.1} parent=1 // pred_region
      %30 = dma.done [#allocation3], 2048
    $region17: #{tpu_custom_call.1} parent=1 // pred_fallthru
      _
    %v31 = vld [vmem:[%s0] sm:$0xff]
    %v32 = vld [vmem:[#allocation2] sm:$0xff]
    %v33 = vld [vmem:[#allocation2 + $0x8] sm:$0xff]
    %v34 = vld [vmem:[#allocation2 + $0x10] sm:$0xff]
    %v35 = vld [vmem:[#allocation2 + $0x18] sm:$0xff]
    %v36 = vld [vmem:[#allocation2 + $0x20] sm:$0xff]
    %v37 = vld [vmem:[#allocation2 + $0x28] sm:$0xff]
    %v38 = vld [vmem:[#allocation2 + $0x30] sm:$0xff]
    %v39 = vld [vmem:[#allocation2 + $0x38] sm:$0xff]
    %v40 = vld [vmem:[#allocation2 + $0x40] sm:$0xff]
    %v41 = vld [vmem:[#allocation2 + $0x48] sm:$0xff]
    %v42 = vld [vmem:[#allocation2 + $0x50] sm:$0xff]
    %v43 = vld [vmem:[#allocation2 + $0x58] sm:$0xff]
    %v44 = vld [vmem:[#allocation2 + $0x60] sm:$0xff]
    %v45 = vld [vmem:[#allocation2 + $0x68] sm:$0xff]
    %v46 = vld [vmem:[#allocation2 + $0x70] sm:$0xff]
    %v47 = vld [vmem:[#allocation2 + $0x78] sm:$0xff]
    %v48 = vmul.f32 %v31, %v31
    %49 = vadd.xlane.f32.xlu0 %v48
    %v50 = vpop.xlane.xlu0 %49
    %v51 = vmax.f32 %v50, 1e-24
    %v52 = vrsqrt.pop %v51
    %v53 = vmul.f32 %v52, %v51
    %v54 = vmul.f32 %v53, %v52
    %v55 = vmul.f32 0.5, %v54
    %v56 = vsub.f32 1.5, %v55
    %v57 = vmul.f32 %v52, %v56
    %vm58 = vweird.f32 %v51
    %vm59 = vweird.f32 %v52
    %vm60 = vmor %vm58, %vm59
    %v61 = vsel %vm60, %v52, %v57
    %v62 = vmul.f32 %v31, %v61
    %v63 = vmul.f32 %v32, %v32
    %v64 = vmul.f32 %v33, %v33
    %v65 = vmul.f32 %v34, %v34
    %v66 = vmul.f32 %v35, %v35
    %v67 = vmul.f32 %v36, %v36
    %v68 = vmul.f32 %v37, %v37
    %v69 = vmul.f32 %v38, %v38
    %v70 = vmul.f32 %v39, %v39
    %v71 = vmul.f32 %v40, %v40
    %v72 = vmul.f32 %v41, %v41
    %v73 = vmul.f32 %v42, %v42
    %v74 = vmul.f32 %v43, %v43
    %v75 = vmul.f32 %v44, %v44
    %v76 = vmul.f32 %v45, %v45
    %v77 = vmul.f32 %v46, %v46
    %v78 = vmul.f32 %v47, %v47
    %79 = vadd.xlane.f32.xlu0 %v63
    %v80 = vpop.xlane.xlu0 %79
    %81 = vadd.xlane.f32.xlu0 %v64
    %v82 = vpop.xlane.xlu0 %81
    %83 = vadd.xlane.f32.xlu0 %v65
    %v84 = vpop.xlane.xlu0 %83
    %85 = vadd.xlane.f32.xlu0 %v66
    %v86 = vpop.xlane.xlu0 %85
    %87 = vadd.xlane.f32.xlu0 %v67
    %v88 = vpop.xlane.xlu0 %87
    %89 = vadd.xlane.f32.xlu0 %v68
    %v90 = vpop.xlane.xlu0 %89
    %91 = vadd.xlane.f32.xlu0 %v69
    %v92 = vpop.xlane.xlu0 %91
    %93 = vadd.xlane.f32.xlu0 %v70
    %v94 = vpop.xlane.xlu0 %93
    %95 = vadd.xlane.f32.xlu0 %v71
    %v96 = vpop.xlane.xlu0 %95
    %97 = vadd.xlane.f32.xlu0 %v72
    %v98 = vpop.xlane.xlu0 %97
    %99 = vadd.xlane.f32.xlu0 %v73
    %v100 = vpop.xlane.xlu0 %99
    %101 = vadd.xlane.f32.xlu0 %v74
    %v102 = vpop.xlane.xlu0 %101
    %103 = vadd.xlane.f32.xlu0 %v75
    %v104 = vpop.xlane.xlu0 %103
    %105 = vadd.xlane.f32.xlu0 %v76
    %v106 = vpop.xlane.xlu0 %105
    %107 = vadd.xlane.f32.xlu0 %v77
    %v108 = vpop.xlane.xlu0 %107
    %109 = vadd.xlane.f32.xlu0 %v78
    %v110 = vpop.xlane.xlu0 %109
    %v111 = vmax.f32 %v80, 1e-24
    %v112 = vmax.f32 %v82, 1e-24
    %v113 = vmax.f32 %v84, 1e-24
    %v114 = vmax.f32 %v86, 1e-24
    %v115 = vmax.f32 %v88, 1e-24
    %v116 = vmax.f32 %v90, 1e-24
    %v117 = vmax.f32 %v92, 1e-24
    %v118 = vmax.f32 %v94, 1e-24
    %v119 = vmax.f32 %v96, 1e-24
    %v120 = vmax.f32 %v98, 1e-24
    %v121 = vmax.f32 %v100, 1e-24
    %v122 = vmax.f32 %v102, 1e-24
    %v123 = vmax.f32 %v104, 1e-24
    %v124 = vmax.f32 %v106, 1e-24
    %v125 = vmax.f32 %v108, 1e-24
    %v126 = vmax.f32 %v110, 1e-24
    %v127 = vrsqrt.pop %v111
    %v128 = vmul.f32 %v127, %v111
    %v129 = vmul.f32 %v128, %v127
    %v130 = vmul.f32 0.5, %v129
    %v131 = vsub.f32 1.5, %v130
    %v132 = vmul.f32 %v127, %v131
    %vm133 = vweird.f32 %v111
    %vm134 = vweird.f32 %v127
    %vm135 = vmor %vm133, %vm134
    %v136 = vsel %vm135, %v127, %v132
    %v137 = vrsqrt.pop %v112
    %v138 = vmul.f32 %v137, %v112
    %v139 = vmul.f32 %v138, %v137
    %v140 = vmul.f32 0.5, %v139
    %v141 = vsub.f32 1.5, %v140
    %v142 = vmul.f32 %v137, %v141
    %vm143 = vweird.f32 %v112
    %vm144 = vweird.f32 %v137
    %vm145 = vmor %vm143, %vm144
    %v146 = vsel %vm145, %v137, %v142
    %v147 = vrsqrt.pop %v113
    %v148 = vmul.f32 %v147, %v113
    %v149 = vmul.f32 %v148, %v147
    %v150 = vmul.f32 0.5, %v149
    %v151 = vsub.f32 1.5, %v150
    %v152 = vmul.f32 %v147, %v151
    %vm153 = vweird.f32 %v113
    %vm154 = vweird.f32 %v147
    %vm155 = vmor %vm153, %vm154
    %v156 = vsel %vm155, %v147, %v152
    %v157 = vrsqrt.pop %v114
    %v158 = vmul.f32 %v157, %v114
    %v159 = vmul.f32 %v158, %v157
    %v160 = vmul.f32 0.5, %v159
    %v161 = vsub.f32 1.5, %v160
    %v162 = vmul.f32 %v157, %v161
    %vm163 = vweird.f32 %v114
    %vm164 = vweird.f32 %v157
    %vm165 = vmor %vm163, %vm164
    %v166 = vsel %vm165, %v157, %v162
    %v167 = vrsqrt.pop %v115
    %v168 = vmul.f32 %v167, %v115
    %v169 = vmul.f32 %v168, %v167
    %v170 = vmul.f32 0.5, %v169
    %v171 = vsub.f32 1.5, %v170
    %v172 = vmul.f32 %v167, %v171
    %vm173 = vweird.f32 %v115
    %vm174 = vweird.f32 %v167
    %vm175 = vmor %vm173, %vm174
    %v176 = vsel %vm175, %v167, %v172
    %v177 = vrsqrt.pop %v116
    %v178 = vmul.f32 %v177, %v116
    %v179 = vmul.f32 %v178, %v177
    %v180 = vmul.f32 0.5, %v179
    %v181 = vsub.f32 1.5, %v180
    %v182 = vmul.f32 %v177, %v181
    %vm183 = vweird.f32 %v116
    %vm184 = vweird.f32 %v177
    %vm185 = vmor %vm183, %vm184
    %v186 = vsel %vm185, %v177, %v182
    %v187 = vrsqrt.pop %v117
    %v188 = vmul.f32 %v187, %v117
    %v189 = vmul.f32 %v188, %v187
    %v190 = vmul.f32 0.5, %v189
    %v191 = vsub.f32 1.5, %v190
    %v192 = vmul.f32 %v187, %v191
    %vm193 = vweird.f32 %v117
    %vm194 = vweird.f32 %v187
    %vm195 = vmor %vm193, %vm194
    %v196 = vsel %vm195, %v187, %v192
    %v197 = vrsqrt.pop %v118
    %v198 = vmul.f32 %v197, %v118
    %v199 = vmul.f32 %v198, %v197
    %v200 = vmul.f32 0.5, %v199
    %v201 = vsub.f32 1.5, %v200
    %v202 = vmul.f32 %v197, %v201
    %vm203 = vweird.f32 %v118
    %vm204 = vweird.f32 %v197
    %vm205 = vmor %vm203, %vm204
    %v206 = vsel %vm205, %v197, %v202
    %v207 = vrsqrt.pop %v119
    %v208 = vmul.f32 %v207, %v119
    %v209 = vmul.f32 %v208, %v207
    %v210 = vmul.f32 0.5, %v209
    %v211 = vsub.f32 1.5, %v210
    %v212 = vmul.f32 %v207, %v211
    %vm213 = vweird.f32 %v119
    %vm214 = vweird.f32 %v207
    %vm215 = vmor %vm213, %vm214
    %v216 = vsel %vm215, %v207, %v212
    %v217 = vrsqrt.pop %v120
    %v218 = vmul.f32 %v217, %v120
    %v219 = vmul.f32 %v218, %v217
    %v220 = vmul.f32 0.5, %v219
    %v221 = vsub.f32 1.5, %v220
    %v222 = vmul.f32 %v217, %v221
    %vm223 = vweird.f32 %v120
    %vm224 = vweird.f32 %v217
    %vm225 = vmor %vm223, %vm224
    %v226 = vsel %vm225, %v217, %v222
    %v227 = vrsqrt.pop %v121
    %v228 = vmul.f32 %v227, %v121
    %v229 = vmul.f32 %v228, %v227
    %v230 = vmul.f32 0.5, %v229
    %v231 = vsub.f32 1.5, %v230
    %v232 = vmul.f32 %v227, %v231
    %vm233 = vweird.f32 %v121
    %vm234 = vweird.f32 %v227
    %vm235 = vmor %vm233, %vm234
    %v236 = vsel %vm235, %v227, %v232
    %v237 = vrsqrt.pop %v122
    %v238 = vmul.f32 %v237, %v122
    %v239 = vmul.f32 %v238, %v237
    %v240 = vmul.f32 0.5, %v239
    %v241 = vsub.f32 1.5, %v240
    %v242 = vmul.f32 %v237, %v241
    %vm243 = vweird.f32 %v122
    %vm244 = vweird.f32 %v237
    %vm245 = vmor %vm243, %vm244
    %v246 = vsel %vm245, %v237, %v242
    %v247 = vrsqrt.pop %v123
    %v248 = vmul.f32 %v247, %v123
    %v249 = vmul.f32 %v248, %v247
    %v250 = vmul.f32 0.5, %v249
    %v251 = vsub.f32 1.5, %v250
    %v252 = vmul.f32 %v247, %v251
    %vm253 = vweird.f32 %v123
    %vm254 = vweird.f32 %v247
    %vm255 = vmor %vm253, %vm254
    %v256 = vsel %vm255, %v247, %v252
    %v257 = vrsqrt.pop %v124
    %v258 = vmul.f32 %v257, %v124
    %v259 = vmul.f32 %v258, %v257
    %v260 = vmul.f32 0.5, %v259
    %v261 = vsub.f32 1.5, %v260
    %v262 = vmul.f32 %v257, %v261
    %vm263 = vweird.f32 %v124
    %vm264 = vweird.f32 %v257
    %vm265 = vmor %vm263, %vm264
    %v266 = vsel %vm265, %v257, %v262
    %v267 = vrsqrt.pop %v125
    %v268 = vmul.f32 %v267, %v125
    %v269 = vmul.f32 %v268, %v267
    %v270 = vmul.f32 0.5, %v269
    %v271 = vsub.f32 1.5, %v270
    %v272 = vmul.f32 %v267, %v271
    %vm273 = vweird.f32 %v125
    %vm274 = vweird.f32 %v267
    %vm275 = vmor %vm273, %vm274
    %v276 = vsel %vm275, %v267, %v272
    %v277 = vrsqrt.pop %v126
    %v278 = vmul.f32 %v277, %v126
    %v279 = vmul.f32 %v278, %v277
    %v280 = vmul.f32 0.5, %v279
    %v281 = vsub.f32 1.5, %v280
    %v282 = vmul.f32 %v277, %v281
    %vm283 = vweird.f32 %v126
    %vm284 = vweird.f32 %v277
    %vm285 = vmor %vm283, %vm284
    %v286 = vsel %vm285, %v277, %v282
    %v287 = vmul.f32 %v32, %v136
    %v288 = vmul.f32 %v33, %v146
    %v289 = vmul.f32 %v34, %v156
    %v290 = vmul.f32 %v35, %v166
    %v291 = vmul.f32 %v36, %v176
    %v292 = vmul.f32 %v37, %v186
    %v293 = vmul.f32 %v38, %v196
    %v294 = vmul.f32 %v39, %v206
    %v295 = vmul.f32 %v40, %v216
    %v296 = vmul.f32 %v41, %v226
    %v297 = vmul.f32 %v42, %v236
    %v298 = vmul.f32 %v43, %v246
    %v299 = vmul.f32 %v44, %v256
    %v300 = vmul.f32 %v45, %v266
    %v301 = vmul.f32 %v46, %v276
    %v302 = vmul.f32 %v47, %v286
    %303 = vmatpush.xpose.msra.mxu0 %v302
    %304 = vmatpush.xpose.msra.mxu0 %v301
    %305 = vmatpush.xpose.msra.mxu0 %v300
    %306 = vmatpush.xpose.msra.mxu0 %v299
    %307 = vmatpush.xpose.msra.mxu0 %v298
    %308 = vmatpush.xpose.msra.mxu0 %v297
    %309 = vmatpush.xpose.msra.mxu0 %v296
    %310 = vmatpush.xpose.msra.mxu0 %v295
    %311 = vmatpush.xpose.msra.mxu0 %v294
    %312 = vmatpush.xpose.msra.mxu0 %v293
    %313 = vmatpush.xpose.msra.mxu0 %v292
    %314 = vmatpush.xpose.msra.mxu0 %v291
    %315 = vmatpush.xpose.msra.mxu0 %v290
    %316 = vmatpush.xpose.msra.mxu0 %v289
    %317 = vmatpush.xpose.msra.mxu0 %v288
    %318 = vmatpush.xpose.msra.mxu0 %v287
    %319 = vmatmul.f32.gmra.mxu0 %v62
    %v320 = vpop.f32.mrf.mxu0
    %v321 = vadd.f32 0.0, %v320
    %322 = vdwg.mxu0
    %v323 = vmul.f32 %v321, %v321
    %v324 = vsub.f32 1.0, %v323
    %v325 = vmax.f32 %v324, 0.0
    %v326 = vrsqrt.pop %v325
    %v327 = vmul.f32 %v326, %v325
    %v328 = vmul.f32 %v327, %v326
    %v329 = vmul.f32 0.5, %v328
    %v330 = vsub.f32 1.5, %v329
    %v331 = vmul.f32 %v326, %v330
    %v332 = vmul.f32 %v325, %v331
    %vm333 = vcmp.eq.f32.partialorder %v325, inf
    %v334 = vsel %vm333, %v325, %v332
    %vm335 = vcmp.eq.f32.partialorder %v325, 0.0
    %v336 = vand.u32 %v325, 2147483648
    %v337 = vsel %vm335, %v336, %v334
    %v338 = vmul.f32 %v321, 0.87758255
    %v339 = vmul.f32 %v337, 0.47942555
    %v340 = vsub.f32 %v338, %v339
    %v341 = vsub.f32 %v321, -0.87758255
    %vm342 = vcmp.gt.f32.partialorder %v341, 0.0
    %v343 = vsub.f32 %v321, 0.23971277
    %v344 = vsel %vm342, %v340, %v343
    %v345 = vlaneseq
    %v346 = vand.u32 %v345, 127
    %s347 = smul.u32 0, 128
    %v348 = vstv %s347
    %v349 = vadd.s32 %v346, %v348
    %v350 = vld [vmem:[%s2] sm:$0xff]
    %351 = vset.pattern.permute.xlu0 0
    %352 = vperm.xlu0 %351, %v350
    %v353 = vpop.permute.xlu0 %352
    %vm354 = vcmp.eq.s32.totalorder %v349, %v353
    %v355 = vsel %vm354, %v344, %v321
    %v356 = vmul.f32 %v355, 32.0
    %357 = vst [vmem:[#allocation5] sm:$0xff] %v356
    // Predicated region
    $region18: #{tpu_custom_call.1} parent=1 // pred_check
      _
    $region19: #{tpu_custom_call.1} parent=1 // pred_check_branch
      %359 = sbr.rel (0) target = $region21
    $region20: #{tpu_custom_call.1} parent=1 // pred_region
      %361 = vsyncadd [#allocation4], 0
      %s363 = sshll.u32 [#allocation5], 4
      %s364 = int_to_ptr.vmem [resolvable:$true] %s363
      %s365 = sshll.u32 %s3, 4
      %s366 = int_to_ptr.hbm [resolvable:$true] %s365
      %368 = dma.vmem_to_hbm [thread:$0]  %s364, 128, %s366, [#allocation4]
    $region21: #{tpu_custom_call.1} parent=1 // pred_fallthru
      _
    // Predicated region
    $region22: #{tpu_custom_call.1} parent=1 // pred_check
      _
    $region23: #{tpu_custom_call.1} parent=1 // pred_check_branch
      %370 = sbr.rel (0) target = $region25
    $region24: #{tpu_custom_call.1} parent=1 // pred_region
      %372 = dma.done [#allocation4], 128
    $region25: #{tpu_custom_call.1} parent=1 // pred_fallthru
      _
    %373 = vsyncpa [#allocation3], 1
    %374 = vsyncpa [#allocation4], 1

</llo_original>
